<compile_context>
chip_gen: v7x
topology: tpu7x:2x2x1
jax: 0.10.0
libtpu: 0.0.40
codegen_flags: <defaults>
</compile_context>

<pallas_src>
import math

import jax
import jax.numpy as jnp
from jax import lax
from jax.experimental import pallas as pl
from jax.experimental.pallas import tpu as pltpu


def _gelu_exact(x):
    # PyTorch nn.GELU() default is the exact erf formulation (computed in f32).
    return 0.5 * x * (1.0 + lax.erf(x * (1.0 / math.sqrt(2.0))))


def mlp_kernel(x_ref, w1_ref, b1_ref, w2_ref, b2_ref, o_ref, acc_ref):
    k = pl.program_id(1)

    @pl.when(k == 0)
    def _init():
        acc_ref[...] = jnp.zeros_like(acc_ref)

    # fc1 slab: (tm, IN) @ (IN, th) on the MXU (bf16 in, f32 accumulate).
    h = jnp.dot(x_ref[...], w1_ref[...], preferred_element_type=jnp.float32)
    h = _gelu_exact(h + b1_ref[...])  # bias + exact GELU in f32 (columnwise, so slab-local)
    # fc2 slab contribution: (tm, th) @ (th, OUT), accumulated in f32 VMEM scratch.
    acc_ref[...] += jnp.dot(h.astype(jnp.bfloat16), w2_ref[...],
                            preferred_element_type=jnp.float32)

    @pl.when(k == pl.num_programs(1) - 1)
    def _finalize():
        o_ref[...] = _gelu_exact(acc_ref[...] + b2_ref[...]).astype(o_ref.dtype)


def _round_up(x, m):
    return ((x + m - 1) // m) * m


def _pick_hid_tile(hid):
    # Prefer lane-dense slabs that divide HID (512 for 3072, 384 for 768, ...);
    # small / awkward hidden dims fall back to the whole hidden dimension.
    for cand in (512, 384, 256, 128):
        if hid % cand == 0:
            return cand
    return hid


def mlp_pallas(x, w1, b1, w2, b2, *, tm=512):
    """x: (M, IN); w1: (IN, HID); b1: (HID,); w2: (HID, OUT); b2: (OUT,). Returns f32 (M, OUT)."""
    M, IN = x.shape
    HID = w1.shape[1]
    OUT = w2.shape[1]

    # --- tiling (no divisibility requirement on M: cdiv + pad) ---
    tm = _round_up(max(8, min(tm, _round_up(M, 8))), 8)
    M_pad = _round_up(M, tm)
    th = _pick_hid_tile(HID)
    grid = (M_pad // tm, HID // th)

    # --- operand prep: bf16 MXU inputs, f32 biases, pad token rows to the tile ---
    xb = x.astype(jnp.bfloat16)
    if M_pad != M:
        xb = jnp.pad(xb, ((0, M_pad - M), (0, 0)))
    w1b = w1.astype(jnp.bfloat16)
    w2b = w2.astype(jnp.bfloat16)
    b1_2d = b1.reshape(1, HID).astype(jnp.float32)
    b2_2d = b2.reshape(1, OUT).astype(jnp.float32)

    # --- VMEM budget: double-buffered streamed operands + f32 accumulator + hidden tile ---
    vmem_needed = (
        2 * (tm * IN * 2)        # x tile (bf16), double-buffered
        + 2 * (IN * th * 2)      # fc1 weight slab (bf16)
        + 2 * (th * 4)           # fc1 bias slab (f32)
        + 2 * (th * OUT * 2)     # fc2 weight slab (bf16)
        + 2 * (OUT * 4)          # fc2 bias (f32)
        + 2 * (tm * OUT * 4)     # output tile (f32)
        + tm * OUT * 4           # accumulator scratch (f32)
        + tm * th * 4            # hidden intermediate (f32)
    )
    vmem_limit = min(max(2 * vmem_needed + (4 << 20), 32 << 20), 64 << 20)

    cost = pl.CostEstimate(
        flops=2 * M_pad * (IN * HID + HID * OUT),
        transcendentals=M_pad * (HID + OUT),  # one erf per GELU element
        bytes_accessed=(M_pad * IN * 2 + IN * HID * 2 + HID * OUT * 2
                        + (HID + OUT) * 4 + M_pad * OUT * 4),
    )

    out = pl.pallas_call(
        mlp_kernel,
        out_shape=jax.ShapeDtypeStruct((M_pad, OUT), jnp.float32),
        grid_spec=pltpu.PrefetchScalarGridSpec(
            num_scalar_prefetch=0,
            grid=grid,
            in_specs=[
                pl.BlockSpec((tm, IN), lambda i, k: (i, 0)),   # x rows (constant over k)
                pl.BlockSpec((IN, th), lambda i, k: (0, k)),   # fc1 weight slab
                pl.BlockSpec((1, th), lambda i, k: (0, k)),    # fc1 bias slab
                pl.BlockSpec((th, OUT), lambda i, k: (k, 0)),  # fc2 weight slab
                pl.BlockSpec((1, OUT), lambda i, k: (0, 0)),   # fc2 bias
            ],
            out_specs=pl.BlockSpec((tm, OUT), lambda i, k: (i, 0)),
            scratch_shapes=[pltpu.VMEM((tm, OUT), jnp.float32)],
        ),
        compiler_params=pltpu.CompilerParams(
            dimension_semantics=("parallel", "arbitrary"),
            vmem_limit_bytes=vmem_limit,
        ),
        cost_estimate=cost,
    )(xb, w1b, b1_2d, w2b, b2_2d)

    return out[:M] if M_pad != M else out


def init_linear_params(key, fan_in, fan_out):
    # Mirrors torch.nn.Linear default init: U(-1/sqrt(fan_in), 1/sqrt(fan_in)).
    # Weight stored pre-transposed as (fan_in, fan_out) so the kernel does x @ W.
    kw, kb = jax.random.split(key)
    bound = 1.0 / math.sqrt(fan_in)
    w = jax.random.uniform(kw, (fan_in, fan_out), jnp.float32, -bound, bound)
    b = jax.random.uniform(kb, (fan_out,), jnp.float32, -bound, bound)
    return w, b


if __name__ == "__main__":
    # Small ViT-MLP-ish shapes: batch=2, seq=8, in=32, hidden=64, out=32
    # (Dropout p=0.0 in the reference module is not applied in forward() anyway.)
    B, S, IN, HID, OUT = 2, 8, 32, 64, 32
    key = jax.random.PRNGKey(0)
    kx, k1, k2 = jax.random.split(key, 3)

    x = jax.random.normal(kx, (B, S, IN), jnp.float32)
    w1, b1 = init_linear_params(k1, IN, HID)
    w2, b2 = init_linear_params(k2, HID, OUT)

    # flatten tokens for the kernel, reshape back after (glue in plain JAX)
    x2d = x.reshape(B * S, IN)
    out2d = mlp_pallas(x2d, w1, b1, w2, b2)
    out = out2d.reshape(B, S, OUT)
    jax.block_until_ready(out)

    # Reference 1: mirror of the kernel's bf16-input / f32-accumulate math (tight check).
    def bf(a):
        return a.astype(jnp.bfloat16).astype(jnp.float32)
    h_ref = _gelu_exact(bf(x2d) @ bf(w1) + b1)
    ref_mirror = _gelu_exact(bf(h_ref) @ bf(w2) + b2).reshape(B, S, OUT)
    assert jnp.allclose(out, ref_mirror, atol=5e-3, rtol=5e-3), "mismatch vs bf16-mirrored reference"

    # Reference 2: full-f32 reference of the original module (loose: bf16 MXU inputs).
    ref_f32 = _gelu_exact(_gelu_exact(x @ w1 + b1) @ w2 + b2)
    assert jnp.allclose(out, ref_f32, atol=5e-2, rtol=5e-2), "mismatch vs f32 reference"

    print("KERNEL_OK")
</pallas_src>

<mosaic_0001>
module attributes {stable_mosaic.version = 11 : i64} {
  func.func @mlp_kernel(%arg0: i32, %arg1: i32, %arg2: memref<16x32xbf16, #tpu.memory_space<vmem>>, %arg3: memref<32x64xbf16, #tpu.memory_space<vmem>>, %arg4: memref<1x64xf32, #tpu.memory_space<vmem>>, %arg5: memref<64x32xbf16, #tpu.memory_space<vmem>>, %arg6: memref<1x32xf32, #tpu.memory_space<vmem>>, %arg7: memref<16x32xf32, #tpu.memory_space<vmem>>, %arg8: memref<16x32xf32, #tpu.memory_space<vmem>>) attributes {dimension_semantics = [#tpu.dimension_semantics<parallel>, #tpu.dimension_semantics<arbitrary>], iteration_bounds = array<i64: 1, 1>, scalar_prefetch = 0 : i64, scratch_operands = 1 : i64, tpu.core_type = #tpu.core_type<tc>, window_params = [{transform_indices = @transform_0, window_bounds = array<i64: 16, 32>}, {transform_indices = @transform_1, window_bounds = array<i64: 32, 64>}, {transform_indices = @transform_2, window_bounds = array<i64: 1, 64>}, {transform_indices = @transform_3, window_bounds = array<i64: 64, 32>}, {pipeline_mode = #tpu.pipeline_mode<synchronous>, transform_indices = @transform_4, window_bounds = array<i64: 1, 32>}, {transform_indices = @transform_5, window_bounds = array<i64: 16, 32>}]} {
    %c0_i32 = arith.constant 0 : i32
    %0 = arith.cmpi eq, %arg1, %c0_i32 : i32
    %1 = arith.extui %0 : i1 to i32
    %c0_i32_0 = arith.constant 0 : i32
    %2 = arith.cmpi ne, %1, %c0_i32_0 : i32
    scf.if %2 {
      %cst_18 = arith.constant 0.000000e+00 : f32
      %26 = vector.broadcast %cst_18 : f32 to vector<16x32xf32>
      %c0_19 = arith.constant 0 : index
      %c0_20 = arith.constant 0 : index
      %27 = vector.load %arg8[%c0_19, %c0_20] : memref<16x32xf32, #tpu.memory_space<vmem>>, vector<16x32xf32>
      tpu.vector_store %arg8[%c0_19, %c0_20], %26 {strides = array<i32>} : memref<16x32xf32, #tpu.memory_space<vmem>>, vector<16x32xf32>,
    } else {
    }
    %c0 = arith.constant 0 : index
    %c0_1 = arith.constant 0 : index
    %3 = vector.load %arg2[%c0, %c0_1] : memref<16x32xbf16, #tpu.memory_space<vmem>>, vector<16x32xbf16>
    %c0_2 = arith.constant 0 : index
    %c0_3 = arith.constant 0 : index
    %4 = vector.load %arg3[%c0_2, %c0_3] : memref<32x64xbf16, #tpu.memory_space<vmem>>, vector<32x64xbf16>
    %cst = arith.constant dense<0.000000e+00> : vector<16x64xf32>
    %5 = tpu.matmul %3, %4, %cst {dimension_numbers = #tpu.dot_dimension_numbers<[1], [0], [0], [1], [0, 0, 1, 1], [], []>} : vector<16x32xbf16>, vector<32x64xbf16>, vector<16x64xf32> -> vector<16x64xf32>
    %c0_4 = arith.constant 0 : index
    %c0_5 = arith.constant 0 : index
    %6 = vector.load %arg4[%c0_4, %c0_5] : memref<1x64xf32, #tpu.memory_space<vmem>>, vector<1x64xf32>
    %7 = vector.broadcast %6 : vector<1x64xf32> to vector<16x64xf32>
    %8 = arith.addf %5, %7 : vector<16x64xf32>
    %cst_6 = arith.constant 5.000000e-01 : f32
    %9 = vector.broadcast %cst_6 : f32 to vector<16x64xf32>
    %10 = arith.mulf %9, %8 : vector<16x64xf32>
    %cst_7 = arith.constant 0.707106769 : f32
    %11 = vector.broadcast %cst_7 : f32 to vector<16x64xf32>
    %12 = arith.mulf %8, %11 : vector<16x64xf32>
    %13 = math.erf %12 : vector<16x64xf32>
    %cst_8 = arith.constant 1.000000e+00 : f32
    %14 = vector.broadcast %cst_8 : f32 to vector<16x64xf32>
    %15 = arith.addf %14, %13 : vector<16x64xf32>
    %16 = arith.mulf %10, %15 : vector<16x64xf32>
    %c0_9 = arith.constant 0 : index
    %c0_10 = arith.constant 0 : index
    %17 = vector.load %arg8[%c0_9, %c0_10] : memref<16x32xf32, #tpu.memory_space<vmem>>, vector<16x32xf32>
    %18 = arith.truncf %16 : vector<16x64xf32> to vector<16x64xbf16>
    %c0_11 = arith.constant 0 : index
    %c0_12 = arith.constant 0 : index
    %19 = vector.load %arg5[%c0_11, %c0_12] : memref<64x32xbf16, #tpu.memory_space<vmem>>, vector<64x32xbf16>
    %cst_13 = arith.constant dense<0.000000e+00> : vector<16x32xf32>
    %20 = tpu.matmul %18, %19, %cst_13 {dimension_numbers = #tpu.dot_dimension_numbers<[1], [0], [0], [1], [0, 0, 1, 1], [], []>} : vector<16x64xbf16>, vector<64x32xbf16>, vector<16x32xf32> -> vector<16x32xf32>
    %21 = arith.addf %17, %20 : vector<16x32xf32>
    %c0_14 = arith.constant 0 : index
    %c0_15 = arith.constant 0 : index
    %22 = vector.load %arg8[%c0_14, %c0_15] : memref<16x32xf32, #tpu.memory_space<vmem>>, vector<16x32xf32>
    tpu.vector_store %arg8[%c0_14, %c0_15], %21 {strides = array<i32>} : memref<16x32xf32, #tpu.memory_space<vmem>>, vector<16x32xf32>,
    %c0_i32_16 = arith.constant 0 : i32
    %23 = arith.cmpi eq, %arg1, %c0_i32_16 : i32
    %24 = arith.extui %23 : i1 to i32
    %c0_i32_17 = arith.constant 0 : i32
    %25 = arith.cmpi ne, %24, %c0_i32_17 : i32
    scf.if %25 {
      %c0_18 = arith.constant 0 : index
      %c0_19 = arith.constant 0 : index
      %26 = vector.load %arg8[%c0_18, %c0_19] : memref<16x32xf32, #tpu.memory_space<vmem>>, vector<16x32xf32>
      %c0_20 = arith.constant 0 : index
      %c0_21 = arith.constant 0 : index
      %27 = vector.load %arg6[%c0_20, %c0_21] : memref<1x32xf32, #tpu.memory_space<vmem>>, vector<1x32xf32>
      %28 = vector.broadcast %27 : vector<1x32xf32> to vector<16x32xf32>
      %29 = arith.addf %26, %28 : vector<16x32xf32>
      %cst_22 = arith.constant 5.000000e-01 : f32
      %30 = vector.broadcast %cst_22 : f32 to vector<16x32xf32>
      %31 = arith.mulf %30, %29 : vector<16x32xf32>
      %cst_23 = arith.constant 0.707106769 : f32
      %32 = vector.broadcast %cst_23 : f32 to vector<16x32xf32>
      %33 = arith.mulf %29, %32 : vector<16x32xf32>
      %34 = math.erf %33 : vector<16x32xf32>
      %cst_24 = arith.constant 1.000000e+00 : f32
      %35 = vector.broadcast %cst_24 : f32 to vector<16x32xf32>
      %36 = arith.addf %35, %34 : vector<16x32xf32>
      %37 = arith.mulf %31, %36 : vector<16x32xf32>
      %c0_25 = arith.constant 0 : index
      %c0_26 = arith.constant 0 : index
      %38 = vector.load %arg7[%c0_25, %c0_26] : memref<16x32xf32, #tpu.memory_space<vmem>>, vector<16x32xf32>
      tpu.vector_store %arg7[%c0_25, %c0_26], %37 {strides = array<i32>} : memref<16x32xf32, #tpu.memory_space<vmem>>, vector<16x32xf32>,
    } else {
    }
    return
  }
  func.func @transform_0(%arg0: i32, %arg1: i32) -> (i32, i32) {
    %c0_i32 = arith.constant 0 : i32
    %c0_i32_0 = arith.constant 0 : i32
    return %arg0, %c0_i32 : i32, i32
  }
  func.func @transform_1(%arg0: i32, %arg1: i32) -> (i32, i32) {
    %c0_i32 = arith.constant 0 : i32
    %c0_i32_0 = arith.constant 0 : i32
    return %c0_i32, %arg1 : i32, i32
  }
  func.func @transform_2(%arg0: i32, %arg1: i32) -> (i32, i32) {
    %c0_i32 = arith.constant 0 : i32
    %c0_i32_0 = arith.constant 0 : i32
    return %c0_i32, %arg1 : i32, i32
  }
  func.func @transform_3(%arg0: i32, %arg1: i32) -> (i32, i32) {
    %c0_i32 = arith.constant 0 : i32
    %c0_i32_0 = arith.constant 0 : i32
    return %arg1, %c0_i32 : i32, i32
  }
  func.func @transform_4(%arg0: i32, %arg1: i32) -> (i32, i32) {
    %c0_i32 = arith.constant 0 : i32
    %c0_i32_0 = arith.constant 0 : i32
    %c0_i32_1 = arith.constant 0 : i32
    return %c0_i32, %c0_i32_0 : i32, i32
  }
  func.func @transform_5(%arg0: i32, %arg1: i32) -> (i32, i32) {
    %c0_i32 = arith.constant 0 : i32
    %c0_i32_0 = arith.constant 0 : i32
    return %arg0, %c0_i32 : i32, i32
  }
}

</mosaic_0001>

<llo_original>
// kernel: tpu_custom_call.1
$region0: #{tpu_custom_call.1}
  #allocation0 [shape = 'u32[]', space=smem, size = 0x4, offset = 0x4, fixed_abs, tag = 'smem constant byte address 0x4 - core index']
  #allocation1 [shape = 'u32[144,128]{1,0:T(1,128)}', space=vmem, size = 0x12000, scoped, tag = 'internal scratch']
  #allocation2 [shape = 'f32[16,32]{1,0:T(8,128)}', space=vmem, size = 0x2000, scoped, tag = 'scratch operand']
  %s0 = inlined_call_operand.vmem [shape: bf16[16,32], index: 0, kind: input, shape index: {}]
  %s1 = inlined_call_operand.vmem [shape: bf16[32,64], index: 1, kind: input, shape index: {}]
  %s2 = inlined_call_operand.vmem [shape: f32[1,64], index: 2, kind: input, shape index: {}]
  %s3 = inlined_call_operand.vmem [shape: bf16[64,32], index: 3, kind: input, shape index: {}]
  %s4 = inlined_call_operand.vmem [shape: f32[1,32], index: 4, kind: input, shape index: {}]
  %s5 = inlined_call_operand.hbm [shape: f32[16,32], index: 5, kind: output, shape index: {}]
  %s6 = sld [smem:[#allocation0]]
  $region38: #{tpu_custom_call.1} parent=0
    _
  %s8 = ssub.s32 1, %s6
  %s9 = scalar_select 0, %s8, %s6
  $region1: #{tpu_custom_call.1} parent=0
    #allocation3 [shape = 'u8[8192]{0}', space=vmem, size = 0x2000, scoped, tag = 'output window, operand 0, single buffered']
    #allocation4 [shape = 's32[1]{0}', space=sflag, size = 0x4, scoped, tag = 'scoped memory for tpu_custom_call.1']
    %10 = vsyncpa [#allocation4], 0
    // Predicated region
    $region2: #{tpu_custom_call.1} parent=1 // pred_check
      _
    $region3: #{tpu_custom_call.1} parent=1 // pred_check_branch
      %12 = sbr.rel (0) target = $region5
    $region4: #{tpu_custom_call.1} parent=1 // pred_region
      _
    $region5: #{tpu_custom_call.1} parent=1 // pred_fallthru
      _
    // Predicated region
    $region6: #{tpu_custom_call.1} parent=1 // pred_check
      _
    $region7: #{tpu_custom_call.1} parent=1 // pred_check_branch
      %14 = sbr.rel (0) target = $region9
    $region8: #{tpu_custom_call.1} parent=1 // pred_region
      _
    $region9: #{tpu_custom_call.1} parent=1 // pred_fallthru
      _
    // Predicated region
    $region10: #{tpu_custom_call.1} parent=1 // pred_check
      _
    $region11: #{tpu_custom_call.1} parent=1 // pred_check_branch
      %16 = sbr.rel (0) target = $region13
    $region12: #{tpu_custom_call.1} parent=1 // pred_region
      _
    $region13: #{tpu_custom_call.1} parent=1 // pred_fallthru
      _
    // Predicated region
    $region14: #{tpu_custom_call.1} parent=1 // pred_check
      _
    $region15: #{tpu_custom_call.1} parent=1 // pred_check_branch
      %18 = sbr.rel (0) target = $region17
    $region16: #{tpu_custom_call.1} parent=1 // pred_region
      _
    $region17: #{tpu_custom_call.1} parent=1 // pred_fallthru
      _
    // Predicated region
    $region18: #{tpu_custom_call.1} parent=1 // pred_check
      _
    $region19: #{tpu_custom_call.1} parent=1 // pred_check_branch
      %20 = sbr.rel (0) target = $region21
    $region20: #{tpu_custom_call.1} parent=1 // pred_region
      _
    $region21: #{tpu_custom_call.1} parent=1 // pred_fallthru
      _
    %p22 = scmp.eq.s32.totalorder 0, 0
    // Predicated region
    $region22: #{tpu_custom_call.1} parent=1 // pred_check
      %p23 = pneg %p22
    $region23: #{tpu_custom_call.1} parent=1 // pred_check_branch
      %25 = sbr.rel (%p23) target = $region25
    $region24: #{tpu_custom_call.1} parent=1 // pred_region
      %vm26 = vcmask 261120
      %27 = vst.msk [vmem:[#allocation2] sm:$0xff] %vm26, 0.0
      %28 = vst.msk [vmem:[#allocation2 + $0x8] sm:$0xff] %vm26, 0.0
    $region25: #{tpu_custom_call.1} parent=1 // pred_fallthru
      _
    %v29 = vld [vmem:[%s0] sm:$0xf]
    %v30 = vld [vmem:[%s0 + $0x4] sm:$0xf]
    %v31 = vld [vmem:[%s1] sm:$0xf]
    %v32 = vld [vmem:[%s1 + $0x4] sm:$0xf]
    %v33 = vld [vmem:[%s1 + $0x8] sm:$0xf]
    %v34 = vld [vmem:[%s1 + $0xc] sm:$0xf]
    %v35 = vld [vmem:[%s2] sm:$0x1]
    %v37 = vlaneseq
    %v38 = vshrl.u32 %v37, 7
    %v39 = vsub.s32 0, %v38
    %v40 = vrot.slane %v35, %v39
    %v44 = vunpack.c.l.b16 %v29
    %v45 = vunpack.c.l.b16 %v30
    %v46 = vpack.c.b16 %v45, %v44
    %v51 = vunpack.c.l.b16 %v31
    %v52 = vunpack.c.l.b16 %v32
    %v53 = vunpack.c.l.b16 %v33
    %v54 = vunpack.c.l.b16 %v34
    %v55 = vpack.c.b16 %v52, %v51
    %v56 = vpack.c.b16 %v54, %v53
    %vm59 = vcmask 261120
    %v61 = vsel %vm59, %v46, 0
    %63 = vmatprep.subr.bf16.mxu0 0
    %64 = vmatpush1.bf16.msra.mxu0 %v55
    %65 = vmatprep.subr.bf16.mxu0 0
    %66 = vmatpush1.bf16.msra.mxu0 %v56
    %67 = vmatprep.subr.bf16.mxu0 0
    %68 = vmatpush1.bf16.msra.mxu0 0
    %69 = vmatprep.subr.bf16.mxu0 0
    %70 = vmatpush1.bf16.msra.mxu0 0
    %71 = vmatprep.subr.bf16.mxu0 0
    %72 = vmatpush1.bf16.msra.mxu0 0
    %73 = vmatprep.subr.bf16.mxu0 0
    %74 = vmatpush1.bf16.msra.mxu0 0
    %75 = vmatprep.subr.bf16.mxu0 0
    %76 = vmatpush1.bf16.msra.mxu0 0
    %77 = vmatprep.subr.bf16.mxu0 0
    %78 = vmatpush1.bf16.msra.mxu0 0
    %79 = vmatprep.subr.bf16.mxu0 0
    %80 = vmatpush1.bf16.msra.mxu0 0
    %81 = vmatprep.subr.bf16.mxu0 0
    %82 = vmatpush1.bf16.msra.mxu0 0
    %83 = vmatprep.subr.bf16.mxu0 0
    %84 = vmatpush1.bf16.msra.mxu0 0
    %85 = vmatprep.subr.bf16.mxu0 0
    %86 = vmatpush1.bf16.msra.mxu0 0
    %87 = vmatprep.subr.bf16.mxu0 0
    %88 = vmatpush1.bf16.msra.mxu0 0
    %89 = vmatprep.subr.bf16.mxu0 0
    %90 = vmatpush1.bf16.msra.mxu0 0
    %91 = vmatprep.subr.bf16.mxu0 0
    %92 = vmatpush1.bf16.msra.mxu0 0
    %93 = vmatprep.subr.bf16.mxu0 0
    %94 = vmatpush1.bf16.msra.mxu0 0
    %95 = vmatprep.mubr.bf16.mxu0 0
    %96 = vmatmul.mubr.bf16.gmra.mrb[0].mxu0 %v61
    %v97 = vpop.f32.mrb[0].mxu0
    %v98 = vadd.f32 %v40, %v97
    %v99 = vpop.f32.mrb[0].mxu0
    %v100 = vpop.f32.mrb[0].mxu0
    %v101 = vadd.f32 %v40, %v100
    %v102 = vpop.f32.mrb[0].mxu0
    %103 = vdwg.mxu0
    %v104 = vmul.f32 %v98, 0.5
    %v105 = vmul.f32 %v101, 0.5
    %v106 = vmul.f32 %v98, 0.70710677
    %v107 = vmul.f32 %v101, 0.70710677
    %v108 = verf.f32.pop %v106
    %v109 = verf.f32.pop %v107
    %v110 = vadd.f32 %v108, 1.0
    %v111 = vadd.f32 %v109, 1.0
    %v112 = vmul.f32 %v104, %v110
    %v113 = vmul.f32 %v105, %v111
    %v114 = vld [vmem:[#allocation2] sm:$0xff]
    %v115 = vld [vmem:[#allocation2 + $0x8] sm:$0xff]
    %v116 = vpack.c.bf16 %v113, %v112
    %v117 = vld [vmem:[%s3] sm:$0xf]
    %v118 = vld [vmem:[%s3 + $0x4] sm:$0xf]
    %v119 = vld [vmem:[%s3 + $0x8] sm:$0xf]
    %v120 = vld [vmem:[%s3 + $0xc] sm:$0xf]
    %v121 = vld [vmem:[%s3 + $0x10] sm:$0xf]
    %v122 = vld [vmem:[%s3 + $0x14] sm:$0xf]
    %v123 = vld [vmem:[%s3 + $0x18] sm:$0xf]
    %v124 = vld [vmem:[%s3 + $0x1c] sm:$0xf]
    %v133 = vunpack.c.l.b16 %v117
    %v134 = vunpack.c.l.b16 %v118
    %v135 = vunpack.c.l.b16 %v119
    %v136 = vunpack.c.l.b16 %v120
    %v137 = vunpack.c.l.b16 %v121
    %v138 = vunpack.c.l.b16 %v122
    %v139 = vunpack.c.l.b16 %v123
    %v140 = vunpack.c.l.b16 %v124
    %v141 = vpack.c.b16 %v134, %v133
    %v142 = vpack.c.b16 %v136, %v135
    %v143 = vpack.c.b16 %v138, %v137
    %v144 = vpack.c.b16 %v140, %v139
    %vm149 = vcmask 523264
    %v151 = vsel %vm149, %v116, 0
    %153 = vmatprep.subr.bf16.mxu0 0
    %154 = vmatpush1.bf16.msra.mxu0 %v141
    %155 = vmatprep.subr.bf16.mxu0 0
    %156 = vmatpush1.bf16.msra.mxu0 %v142
    %157 = vmatprep.subr.bf16.mxu0 0
    %158 = vmatpush1.bf16.msra.mxu0 %v143
    %159 = vmatprep.subr.bf16.mxu0 0
    %160 = vmatpush1.bf16.msra.mxu0 %v144
    %161 = vmatprep.subr.bf16.mxu0 0
    %162 = vmatpush1.bf16.msra.mxu0 0
    %163 = vmatprep.subr.bf16.mxu0 0
    %164 = vmatpush1.bf16.msra.mxu0 0
    %165 = vmatprep.subr.bf16.mxu0 0
    %166 = vmatpush1.bf16.msra.mxu0 0
    %167 = vmatprep.subr.bf16.mxu0 0
    %168 = vmatpush1.bf16.msra.mxu0 0
    %169 = vmatprep.subr.bf16.mxu0 0
    %170 = vmatpush1.bf16.msra.mxu0 0
    %171 = vmatprep.subr.bf16.mxu0 0
    %172 = vmatpush1.bf16.msra.mxu0 0
    %173 = vmatprep.subr.bf16.mxu0 0
    %174 = vmatpush1.bf16.msra.mxu0 0
    %175 = vmatprep.subr.bf16.mxu0 0
    %176 = vmatpush1.bf16.msra.mxu0 0
    %177 = vmatprep.subr.bf16.mxu0 0
    %178 = vmatpush1.bf16.msra.mxu0 0
    %179 = vmatprep.subr.bf16.mxu0 0
    %180 = vmatpush1.bf16.msra.mxu0 0
    %181 = vmatprep.subr.bf16.mxu0 0
    %182 = vmatpush1.bf16.msra.mxu0 0
    %183 = vmatprep.subr.bf16.mxu0 0
    %184 = vmatpush1.bf16.msra.mxu0 0
    %185 = vmatprep.mubr.bf16.mxu0 0
    %186 = vmatmul.mubr.bf16.gmra.mrb[0].mxu0 %v151
    %v187 = vpop.f32.mrb[0].mxu0
    %v188 = vadd.f32 0.0, %v187
    %v189 = vpop.f32.mrb[0].mxu0
    %v190 = vpop.f32.mrb[0].mxu0
    %v191 = vadd.f32 0.0, %v190
    %v192 = vpop.f32.mrb[0].mxu0
    %193 = vdwg.mxu0
    %v194 = vadd.f32 %v114, %v188
    %v195 = vadd.f32 %v115, %v191
    %196 = vst.msk [vmem:[#allocation2] sm:$0xff] %vm59, %v194
    %197 = vst.msk [vmem:[#allocation2 + $0x8] sm:$0xff] %vm59, %v195
    // Predicated region
    $region26: #{tpu_custom_call.1} parent=1 // pred_check
      %p198 = pneg %p22
    $region27: #{tpu_custom_call.1} parent=1 // pred_check_branch
      %200 = sbr.rel (%p198) target = $region29
    $region28: #{tpu_custom_call.1} parent=1 // pred_region
      %v201 = vld [vmem:[#allocation2] sm:$0xff]
      %v202 = vld [vmem:[#allocation2 + $0x8] sm:$0xff]
      %v203 = vld [vmem:[%s4] sm:$0x1]
      %v205 = vlaneseq
      %v206 = vshrl.u32 %v205, 7
      %v207 = vsub.s32 0, %v206
      %v208 = vrot.slane %v203, %v207
      %v210 = vadd.f32 %v201, %v208
      %v211 = vadd.f32 %v202, %v208
      %v212 = vmul.f32 %v210, 0.5
      %v213 = vmul.f32 %v211, 0.5
      %v214 = vmul.f32 %v210, 0.70710677
      %v215 = vmul.f32 %v211, 0.70710677
      %v216 = verf.f32.pop %v214
      %v217 = verf.f32.pop %v215
      %v218 = vadd.f32 %v216, 1.0
      %v219 = vadd.f32 %v217, 1.0
      %v220 = vmul.f32 %v212, %v218
      %v221 = vmul.f32 %v213, %v219
      %222 = vst.msk [vmem:[#allocation3] sm:$0xff] %vm59, %v220
      %223 = vst.msk [vmem:[#allocation3 + $0x8] sm:$0xff] %vm59, %v221
    $region29: #{tpu_custom_call.1} parent=1 // pred_fallthru
      _
    // Predicated region
    $region30: #{tpu_custom_call.1} parent=1 // pred_check
      _
    $region31: #{tpu_custom_call.1} parent=1 // pred_check_branch
      %225 = sbr.rel (0) target = $region33
    $region32: #{tpu_custom_call.1} parent=1 // pred_region
      %s227 = ssub.s32 256, 256
      %228 = vsyncadd [#allocation4], %s227
      %s229 = sshll.u32 [#allocation3], 4
      %s230 = int_to_ptr.vmem [resolvable:$true] %s229
      %235 = dma.vmem_to_hbm [thread:$0]  %s230, 256, %s5, [#allocation4], 128, 128, 8
    $region33: #{tpu_custom_call.1} parent=1 // pred_fallthru
      _
    // Predicated region
    $region34: #{tpu_custom_call.1} parent=1 // pred_check
      _
    $region35: #{tpu_custom_call.1} parent=1 // pred_check_branch
      %237 = sbr.rel (0) target = $region37
    $region36: #{tpu_custom_call.1} parent=1 // pred_region
      %238 = dma.done [#allocation4], 256
    $region37: #{tpu_custom_call.1} parent=1 // pred_fallthru
      _
    %239 = vsyncpa [#allocation4], 1

</llo_original>
